<compile_context>
chip_gen: v6e
topology: v6e:2x2x1
jax: 0.10.0
libtpu: 0.0.40
codegen_flags: <defaults>
</compile_context>

<pallas_src>
import functools

import jax
import jax.numpy as jnp
from jax.experimental import pallas as pl
from jax.experimental.pallas import tpu as pltpu


def _round_up(x: int, m: int) -> int:
    return ((x + m - 1) // m) * m


# Buffer budget / scoped limit chosen to fit every generation:
#   v5e / v6e: 128 MiB physical VMEM; v7x: 64 MiB per TensorCore.
_VMEM_BUDGET = 40 * 1024 * 1024   # double-buffered working-set budget
_VMEM_LIMIT = 48 * 1024 * 1024    # scoped limit handed to Mosaic

_TM_LADDER = (256, 128, 64, 32, 16)   # multiples of 16 (bf16 sublane packing)
_TN_LADDER = (1024, 512, 256, 128)    # multiples of 128 (lane-dense stores)


def _pick_tile(size: int, ladder) -> int:
    """Largest ladder entry that minimizes padding of `size` to a multiple."""
    best_t = ladder[0]
    best_pad = _round_up(size, best_t) - size
    for t in ladder[1:]:
        pad = _round_up(size, t) - size
        if pad < best_pad:
            best_t, best_pad = t, pad
    return best_t


def _footprint(tm: int, tn: int, d_in: int, w_bufs: int) -> int:
    """Approximate VMEM bytes for the pipelined buffers."""
    x_b = 2 * tm * d_in * 2          # bf16 x, double-buffered
    w_b = w_bufs * d_in * tn * 2     # bf16 W slab(s)
    b_b = 2 * 8 * tn * 4             # bias (sublane-padded), double-buffered
    o_b = 2 * tm * tn * 4            # f32 output tile, double-buffered
    return x_b + w_b + b_b + o_b


def _ff_fullconnect_kernel(x_ref, w_ref, b_ref, o_ref):
    # x_ref: (TM, D_in) bf16   w_ref: (D_in, TN) bf16
    # b_ref: (1, TN) f32       o_ref: (TM, TN) f32
    x = x_ref[...]

    # torch.norm(x, p='fro', dim=1, keepdim=True) + 0.0001 -> per-row L2 norm.
    # Square-accumulate in f32 (VPU) even though x streams as bf16.
    x32 = x.astype(jnp.float32)
    norm = jnp.sqrt(jnp.sum(x32 * x32, axis=1, keepdims=True)) + 0.0001
    inv_norm = pl.reciprocal(norm, approx=True)  # EUP slot, effectively free.

    # MXU matmul in bf16 with f32 accumulation; apply 1/||x|| to the result
    # rows instead of the (TM, D_in) input (cheaper when TN <= D_in).
    acc = jnp.dot(x, w_ref[...], preferred_element_type=jnp.float32)
    res = acc * inv_norm + b_ref[...]

    # ReLU
    o_ref[...] = jnp.maximum(res, 0.0).astype(o_ref.dtype)


@jax.jit
def ff_fullconnect_forward(x, w, b):
    """Pallas forward of FFFullConnect.

    x: (B, D_in) float32
    w: (D_in, D_out) float32   (transpose of PyTorch's (D_out, D_in) weight)
    b: (D_out,) float32
    returns: (B, D_out) float32
    """
    B, D_in = x.shape
    D_out = w.shape[1]

    # --- Tile selection: minimize padding, then fit the VMEM budget. -------
    tm_eff = _pick_tile(B, _TM_LADDER)
    tn_eff = _pick_tile(D_out, _TN_LADDER)
    # Power-of-two shrinking never increases padding of the padded extents.
    while _footprint(tm_eff, tn_eff, D_in, 2) > _VMEM_BUDGET and tn_eff > 128:
        tn_eff //= 2
    while _footprint(tm_eff, tn_eff, D_in, 2) > _VMEM_BUDGET and tm_eff > 16:
        tm_eff //= 2
    # TODO(synk): for D_in large enough that even (16, 128) tiles blow the
    # budget, a K-tiled variant with a VMEM accumulator + partial-norm
    # accumulation would be needed; not required for typical FF layer sizes.

    b_pad = _round_up(B, tm_eff)
    n_pad = _round_up(D_out, tn_eff)
    m_tiles = b_pad // tm_eff
    n_tiles = n_pad // tn_eff

    # Triple-buffer W across column tiles when it helps and fits.
    w_bufs = 3 if (n_tiles >= 2 and
                   _footprint(tm_eff, tn_eff, D_in, 3) <= _VMEM_BUDGET) else 2

    # --- Padding + dtype prep (zero-padded cols => ReLU(0)=0, sliced off). --
    x_p = x if b_pad == B else jnp.pad(x, ((0, b_pad - B), (0, 0)))
    w_p = w if n_pad == D_out else jnp.pad(w, ((0, 0), (0, n_pad - D_out)))
    b_p = b if n_pad == D_out else jnp.pad(b, ((0, n_pad - D_out),))

    x_bf16 = x_p.astype(jnp.bfloat16)            # halve x HBM traffic
    w_bf16 = w_p.astype(jnp.bfloat16)            # halve W HBM traffic
    b2d = b_p.reshape(1, n_pad).astype(jnp.float32)

    # --- BlockSpecs ---------------------------------------------------------
    x_spec = pl.BlockSpec((tm_eff, D_in), lambda j, i: (i, 0))
    w_spec = pl.BlockSpec((D_in, tn_eff), lambda j, i: (0, j))
    if w_bufs == 3:
        try:
            w_spec = pl.BlockSpec((D_in, tn_eff), lambda j, i: (0, j),
                                  pipeline_mode=pl.Buffered(3))
        except TypeError:
            w_bufs = 2  # older jax: fall back to default double-buffering
    bias_spec = pl.BlockSpec((1, tn_eff), lambda j, i: (0, j))
    out_spec = pl.BlockSpec((tm_eff, tn_eff), lambda j, i: (i, j))

    # x is re-streamed once per column tile; W / bias / out streamed once.
    cost = pl.CostEstimate(
        flops=2 * b_pad * D_in * n_pad,
        transcendentals=2 * b_pad * n_tiles,     # sqrt + reciprocal per (i,j) tile row
        bytes_accessed=(n_tiles * x_bf16.size * 2
                        + w_bf16.size * 2
                        + b2d.size * 4
                        + b_pad * n_pad * 4),
    )

    out = pl.pallas_call(
        _ff_fullconnect_kernel,
        out_shape=jax.ShapeDtypeStruct((b_pad, n_pad), jnp.float32),
        grid_spec=pltpu.PrefetchScalarGridSpec(
            num_scalar_prefetch=0,
            # j (weight-column tile) OUTER, i (row tile) INNER: the W block
            # index (0, j) is constant across inner i, so the W slab stays
            # VMEM-resident.  Leading axis = j so megacore sharding (v7x)
            # splits the W stream across TensorCores instead of doubling it.
            grid=(n_tiles, m_tiles),
            in_specs=[x_spec, w_spec, bias_spec],
            out_specs=out_spec,
        ),
        compiler_params=pltpu.CompilerParams(
            dimension_semantics=("parallel", "parallel"),
            vmem_limit_bytes=_VMEM_LIMIT,
        ),
        cost_estimate=cost,
    )(x_bf16, w_bf16, b2d)

    return out[:B, :D_out]


def _reference_forward(x, w, b):
    norm = jnp.sqrt(jnp.sum(x * x, axis=1, keepdims=True)) + 0.0001
    x_dir = x / norm
    return jnp.maximum(x_dir @ w + b[None, :], 0.0)


# TODO(synk): forward_forward (Adam update, MSELoss, backward) is a training
# loop, not a forward pass; only forward() is implemented as a kernel.

if __name__ == "__main__":
    key = jax.random.PRNGKey(0)
    k_x, k_w, k_b = jax.random.split(key, 3)

    B, D_in, D_out = 8, 32, 16

    # Deterministic parameter init mimicking nn.Linear defaults:
    # weight, bias ~ U(-1/sqrt(D_in), 1/sqrt(D_in))
    bound = 1.0 / jnp.sqrt(jnp.float32(D_in))
    w = jax.random.uniform(k_w, (D_in, D_out), jnp.float32, -bound, bound)
    b = jax.random.uniform(k_b, (D_out,), jnp.float32, -bound, bound)

    x = jax.random.normal(k_x, (B, D_in), jnp.float32)

    out = ff_fullconnect_forward(x, w, b)
    out = jax.block_until_ready(out)

    ref = _reference_forward(x, w, b)
    assert out.shape == (B, D_out)
    # bf16 x/W MXU inputs + approx reciprocal => relaxed tolerance vs f32 ref.
    assert jnp.allclose(out, ref, atol=1e-2, rtol=1e-2), (
        float(jnp.max(jnp.abs(out - ref))))

    print("KERNEL_OK")
</pallas_src>

<mosaic_0001>
module attributes {stable_mosaic.version = 11 : i64} {
  func.func @_ff_fullconnect_kernel(%arg0: i32, %arg1: i32, %arg2: memref<16x32xbf16, #tpu.memory_space<vmem>>, %arg3: memref<32x128xbf16, #tpu.memory_space<vmem>>, %arg4: memref<1x128xf32, #tpu.memory_space<vmem>>, %arg5: memref<16x128xf32, #tpu.memory_space<vmem>>) attributes {dimension_semantics = [#tpu.dimension_semantics<parallel>, #tpu.dimension_semantics<parallel>], iteration_bounds = array<i64: 1, 1>, scalar_prefetch = 0 : i64, scratch_operands = 0 : i64, tpu.core_type = #tpu.core_type<tc>, window_params = [{transform_indices = @transform_0, window_bounds = array<i64: 16, 32>}, {transform_indices = @transform_1, window_bounds = array<i64: 32, 128>}, {transform_indices = @transform_2, window_bounds = array<i64: 1, 128>}, {transform_indices = @transform_3, window_bounds = array<i64: 16, 128>}]} {
    %c0 = arith.constant 0 : index
    %c0_0 = arith.constant 0 : index
    %0 = vector.load %arg2[%c0, %c0_0] : memref<16x32xbf16, #tpu.memory_space<vmem>>, vector<16x32xbf16>
    %1 = arith.extf %0 : vector<16x32xbf16> to vector<16x32xf32>
    %2 = arith.mulf %1, %1 : vector<16x32xf32>
    %cst = arith.constant dense<0.000000e+00> : vector<16xf32>
    %3 = vector.multi_reduction <add>, %2, %cst [1] : vector<16x32xf32> to vector<16xf32>
    %4 = vector.shape_cast %3 : vector<16xf32> to vector<16x1xf32>
    %5 = math.sqrt %4 : vector<16x1xf32>
    %cst_1 = arith.constant 9.99999974E-5 : f32
    %6 = vector.broadcast %cst_1 : f32 to vector<16x1xf32>
    %7 = arith.addf %5, %6 : vector<16x1xf32>
    %8 = tpu.reciprocal %7 {approx = true} : vector<16x1xf32> -> vector<16x1xf32>
    %c0_2 = arith.constant 0 : index
    %c0_3 = arith.constant 0 : index
    %9 = vector.load %arg3[%c0_2, %c0_3] : memref<32x128xbf16, #tpu.memory_space<vmem>>, vector<32x128xbf16>
    %cst_4 = arith.constant dense<0.000000e+00> : vector<16x128xf32>
    %10 = tpu.matmul %0, %9, %cst_4 {dimension_numbers = #tpu.dot_dimension_numbers<[1], [0], [0], [1], [0, 0, 1, 1], [], []>} : vector<16x32xbf16>, vector<32x128xbf16>, vector<16x128xf32> -> vector<16x128xf32>
    %11 = vector.broadcast %8 : vector<16x1xf32> to vector<16x128xf32>
    %12 = arith.mulf %10, %11 : vector<16x128xf32>
    %c0_5 = arith.constant 0 : index
    %c0_6 = arith.constant 0 : index
    %13 = vector.load %arg4[%c0_5, %c0_6] : memref<1x128xf32, #tpu.memory_space<vmem>>, vector<1x128xf32>
    %14 = vector.broadcast %13 : vector<1x128xf32> to vector<16x128xf32>
    %15 = arith.addf %12, %14 : vector<16x128xf32>
    %cst_7 = arith.constant 0.000000e+00 : f32
    %16 = vector.broadcast %cst_7 : f32 to vector<16x128xf32>
    %17 = arith.maximumf %15, %16 : vector<16x128xf32>
    %c0_8 = arith.constant 0 : index
    %c0_9 = arith.constant 0 : index
    %18 = vector.load %arg5[%c0_8, %c0_9] : memref<16x128xf32, #tpu.memory_space<vmem>>, vector<16x128xf32>
    tpu.vector_store %arg5[%c0_8, %c0_9], %17 {strides = array<i32>} : memref<16x128xf32, #tpu.memory_space<vmem>>, vector<16x128xf32>,
    return
  }
  func.func @transform_0(%arg0: i32, %arg1: i32) -> (i32, i32) {
    %c0_i32 = arith.constant 0 : i32
    %c0_i32_0 = arith.constant 0 : i32
    return %arg1, %c0_i32 : i32, i32
  }
  func.func @transform_1(%arg0: i32, %arg1: i32) -> (i32, i32) {
    %c0_i32 = arith.constant 0 : i32
    %c0_i32_0 = arith.constant 0 : i32
    return %c0_i32, %arg0 : i32, i32
  }
  func.func @transform_2(%arg0: i32, %arg1: i32) -> (i32, i32) {
    %c0_i32 = arith.constant 0 : i32
    %c0_i32_0 = arith.constant 0 : i32
    return %c0_i32, %arg0 : i32, i32
  }
  func.func @transform_3(%arg0: i32, %arg1: i32) -> (i32, i32) {
    %c0_i32 = arith.constant 0 : i32
    return %arg1, %arg0 : i32, i32
  }
}

</mosaic_0001>

<llo_original>
// kernel: ff_fullconnect_forward.1
$region0: #{ff_fullconnect_forward.1}
  #allocation0 [shape = 'u32[]', space=smem, size = 0x4, offset = 0x4, fixed_abs, tag = 'smem constant byte address 0x4 - core index']
  #allocation1 [shape = 'u32[144,128]{1,0:T(1,128)}', space=vmem, size = 0x12000, scoped, tag = 'internal scratch']
  %s0 = inlined_call_operand.vmem [shape: bf16[16,32], index: 0, kind: input, shape index: {}]
  %s1 = inlined_call_operand.vmem [shape: bf16[32,128], index: 1, kind: input, shape index: {}]
  %s2 = inlined_call_operand.vmem [shape: f32[1,128], index: 2, kind: input, shape index: {}]
  %s3 = inlined_call_operand.vmem [shape: f32[16,128], index: 3, kind: output, shape index: {}]
  %s4 = sld [smem:[#allocation0]]
  $region22: #{ff_fullconnect_forward.1} parent=0
    _
  %s6 = ssub.s32 1, %s4
  %s7 = scalar_select 0, %s6, %s4
  // Predicated region
  $region2: #{ff_fullconnect_forward.1} parent=0 // pred_check
    _
  $region3: #{ff_fullconnect_forward.1} parent=0 // pred_check_branch
    %9 = sbr.rel (0) target = $region5
  $region4: #{ff_fullconnect_forward.1} parent=0 // pred_region
    _
  $region5: #{ff_fullconnect_forward.1} parent=0 // pred_fallthru
    _
  // Predicated region
  $region6: #{ff_fullconnect_forward.1} parent=0 // pred_check
    _
  $region7: #{ff_fullconnect_forward.1} parent=0 // pred_check_branch
    %11 = sbr.rel (0) target = $region9
  $region8: #{ff_fullconnect_forward.1} parent=0 // pred_region
    _
  $region9: #{ff_fullconnect_forward.1} parent=0 // pred_fallthru
    _
  // Predicated region
  $region10: #{ff_fullconnect_forward.1} parent=0 // pred_check
    _
  $region11: #{ff_fullconnect_forward.1} parent=0 // pred_check_branch
    %13 = sbr.rel (0) target = $region13
  $region12: #{ff_fullconnect_forward.1} parent=0 // pred_region
    _
  $region13: #{ff_fullconnect_forward.1} parent=0 // pred_fallthru
    _
  %v15 = vld [vmem:[%s0] sm:$0xf]
  %v16 = vld [vmem:[%s0 + $0x4] sm:$0xf]
  %v17 = vunpack.c.l.bf16 %v15
  %v18 = vunpack.c.l.bf16 %v16
  %v19 = vmul.f32 %v17, %v17
  %v20 = vmul.f32 %v18, %v18
  %vm21 = vcmask 261120
  %v22 = vsel %vm21, %v19, 0.0
  %23 = vadd.xlane.f32.xlu0 %v22
  %v24 = vpop.xlane.xlu0 %23
  %v25 = vsel %vm21, %v20, 0.0
  %26 = vadd.xlane.f32.xlu0 %v25
  %v27 = vpop.xlane.xlu0 %26
  %v28 = vrsqrt.pop %v24
  %v29 = vmul.f32 %v24, %v28
  %vm30 = vcmp.eq.f32.partialorder %v24, inf
  %v31 = vsel %vm30, %v24, %v29
  %vm32 = vcmp.eq.f32.partialorder %v24, 0.0
  %v33 = vand.u32 %v24, 2147483648
  %v34 = vsel %vm32, %v33, %v31
  %v35 = vrsqrt.pop %v27
  %v36 = vmul.f32 %v27, %v35
  %vm37 = vcmp.eq.f32.partialorder %v27, inf
  %v38 = vsel %vm37, %v27, %v36
  %vm39 = vcmp.eq.f32.partialorder %v27, 0.0
  %v40 = vand.u32 %v27, 2147483648
  %v41 = vsel %vm39, %v40, %v38
  %v42 = vadd.f32 %v34, 0.0001
  %v43 = vadd.f32 %v41, 0.0001
  %v44 = vrcp.pop %v42
  %v45 = vrcp.pop %v43
  %v46 = vld [vmem:[%s1] sm:$0xf]
  %v47 = vld [vmem:[%s1 + $0x4] sm:$0xf]
  %v48 = vld [vmem:[%s1 + $0x8] sm:$0xf]
  %v49 = vld [vmem:[%s1 + $0xc] sm:$0xf]
  %v52 = vunpack.c.l.b16 %v15
  %v53 = vunpack.c.l.b16 %v16
  %v54 = vpack.c.b16 %v53, %v52
  %v59 = vunpack.c.l.b16 %v46
  %v60 = vunpack.c.l.b16 %v47
  %v61 = vunpack.c.l.b16 %v48
  %v62 = vunpack.c.l.b16 %v49
  %v63 = vpack.c.b16 %v60, %v59
  %v64 = vpack.c.b16 %v62, %v61
  %v68 = vsel %vm21, %v54, 0
  %70 = vmatprep.subr.bf16.mxu0 0
  %71 = vmatpush1.bf16.msra.mxu0 0
  %72 = vmatprep.subr.bf16.mxu0 0
  %73 = vmatpush1.bf16.msra.mxu0 0
  %74 = vmatprep.subr.bf16.mxu0 0
  %75 = vmatpush1.bf16.msra.mxu0 0
  %76 = vmatprep.subr.bf16.mxu0 0
  %77 = vmatpush1.bf16.msra.mxu0 0
  %78 = vmatprep.subr.bf16.mxu0 0
  %79 = vmatpush1.bf16.msra.mxu0 0
  %80 = vmatprep.subr.bf16.mxu0 0
  %81 = vmatpush1.bf16.msra.mxu0 0
  %82 = vmatprep.subr.bf16.mxu0 0
  %83 = vmatpush1.bf16.msra.mxu0 %v64
  %84 = vmatprep.subr.bf16.mxu0 0
  %85 = vmatpush1.bf16.msra.mxu0 %v63
  %86 = vmatprep.subr.bf16.mxu0 0
  %87 = vmatpush2.bf16.msra.mxu0 0
  %88 = vmatprep.subr.bf16.mxu0 0
  %89 = vmatpush2.bf16.msra.mxu0 0
  %90 = vmatprep.subr.bf16.mxu0 0
  %91 = vmatpush2.bf16.msra.mxu0 0
  %92 = vmatprep.subr.bf16.mxu0 0
  %93 = vmatpush2.bf16.msra.mxu0 0
  %94 = vmatprep.subr.bf16.mxu0 0
  %95 = vmatpush2.bf16.msra.mxu0 0
  %96 = vmatprep.subr.bf16.mxu0 0
  %97 = vmatpush2.bf16.msra.mxu0 0
  %98 = vmatprep.subr.bf16.mxu0 0
  %99 = vmatpush2.bf16.msra.mxu0 0
  %100 = vmatprep.subr.bf16.mxu0 0
  %101 = vmatpush2.bf16.msra.mxu0 0
  %102 = vmatprep.mubr.bf16.mxu0 0
  %103 = vmatmul.mubr.bf16.gmra.mxu0 %v68
  %v104 = vpop.f32.mrf.mxu0
  %v105 = vadd.f32 0.0, %v104
  %v106 = vpop.f32.mrf.mxu0
  %v107 = vpop.f32.mrf.mxu0
  %v108 = vadd.f32 0.0, %v107
  %v109 = vpop.f32.mrf.mxu0
  %110 = vdwg.mxu0
  %v111 = vmul.f32 %v105, %v44
  %v112 = vmul.f32 %v108, %v45
  %v113 = vld [vmem:[%s2] sm:$0x1]
  %v115 = vlaneseq
  %v116 = vshrl.u32 %v115, 7
  %v117 = vsub.s32 0, %v116
  %v118 = vrot.slane %v113, %v117
  %v120 = vadd.f32 %v111, %v118
  %v121 = vadd.f32 %v112, %v118
  %v122 = vmax.f32 %v120, 0.0
  %v123 = vmax.f32 %v121, 0.0
  %124 = vst [vmem:[%s3] sm:$0xff] %v122
  %125 = vst [vmem:[%s3 + $0x8] sm:$0xff] %v123
  // Predicated region
  $region14: #{ff_fullconnect_forward.1} parent=0 // pred_check
    _
  $region15: #{ff_fullconnect_forward.1} parent=0 // pred_check_branch
    %127 = sbr.rel (0) target = $region17
  $region16: #{ff_fullconnect_forward.1} parent=0 // pred_region
    _
  $region17: #{ff_fullconnect_forward.1} parent=0 // pred_fallthru
    _
  // Predicated region
  $region18: #{ff_fullconnect_forward.1} parent=0 // pred_check
    _
  $region19: #{ff_fullconnect_forward.1} parent=0 // pred_check_branch
    %129 = sbr.rel (0) target = $region21
  $region20: #{ff_fullconnect_forward.1} parent=0 // pred_region
    _
  $region21: #{ff_fullconnect_forward.1} parent=0 // pred_fallthru
    _

</llo_original>
